<compile_context>
chip_gen: v6e
topology: v6e:2x2x1
jax: 0.10.0
libtpu: 0.0.40
codegen_flags: <defaults>
</compile_context>

<pallas_src>
import jax
import jax.numpy as jnp
from jax.experimental import pallas as pl
from jax.experimental.pallas import tpu as pltpu


def _swad_kernel(x_ref, w1_ref, b1_ref, w2_ref, b2_ref, out_ref):
    # x_ref  : (128, Nt)  f32 input tile (cast to compute dtype in-kernel)
    # w1_ref : (128, 128) compute dtype (out, in)   b1_ref : (128, 1) f32
    # w2_ref : (2D, 128)  compute dtype (out, in)   b2_ref : (2D, 1)  f32
    # out_ref: (2D, Nt)   f32
    x = x_ref[...].astype(w1_ref.dtype)                               # in-VMEM cast (VPU)
    h = jnp.dot(w1_ref[...], x, preferred_element_type=jnp.float32)   # (128, Nt)
    h = jnp.maximum(h + b1_ref[...], 0.0)                             # bias + ReLU, f32
    h = h.astype(w2_ref.dtype)                                        # feed MXU at native rate
    y = jnp.dot(w2_ref[...], h, preferred_element_type=jnp.float32)   # (2D, Nt), fused score+width
    out_ref[...] = (y + b2_ref[...]).astype(out_ref.dtype)


def _pick_lane_tile(n, max_tile):
    """Full extent if it fits, else the largest 128-multiple <= max_tile."""
    if n <= max_tile:
        return n
    return max(128, (max_tile // 128) * 128)


def swadnet_dea_forward(vp_features, params, num_angle, num_depth, *,
                        compute_dtype=jnp.bfloat16, out_dtype=jnp.float32,
                        max_g_tile=8192, small_g_threshold=512):
    """vp_features: (B, 128, G) float32, B must be a multiple of num_angle(=12).

    Returns dict with
      grasp_score_pred : (B//num_angle, G, num_angle, num_depth)
      grasp_width_pred : (B//num_angle, G, num_angle, num_depth)
    """
    B, C, G = vp_features.shape
    assert C == 128 and B % num_angle == 0
    D = num_depth
    D2 = 2 * D
    Bp = B // num_angle

    # Weights in PyTorch (out, in) layout; conv_swad kept fused (2D rows).
    w1 = params["w1"].astype(compute_dtype)                     # (128, 128)
    b1 = params["b1"].reshape(C, 1).astype(jnp.float32)         # (128, 1)
    w2 = params["w2"].astype(compute_dtype)                     # (2D, 128)
    b2 = params["b2"].reshape(D2, 1).astype(jnp.float32)        # (2D, 1)

    vmem_limit = 48 * 1024 * 1024   # <= v7x's 64 MiB physical VMEM

    if G < small_g_threshold:
        # Small-G path: fold the batch into the lane axis so lanes are dense.
        # One transpose pass over the (small) input is cheaper than running the
        # whole kernel at ~G/128 lane utilization.
        x_flat = jnp.transpose(vp_features, (1, 0, 2)).reshape(C, B * G)
        N = B * G
        nt = _pick_lane_tile(N, max_g_tile)
        grid = (pl.cdiv(N, nt),)
        y_flat = pl.pallas_call(
            _swad_kernel,
            out_shape=jax.ShapeDtypeStruct((D2, N), out_dtype),
            grid_spec=pltpu.PrefetchScalarGridSpec(
                num_scalar_prefetch=0,
                grid=grid,
                in_specs=[
                    pl.BlockSpec((C, nt), lambda g: (0, g)),     # x (f32, cast in-kernel)
                    pl.BlockSpec((C, C), lambda g: (0, 0)),      # w1 (resident)
                    pl.BlockSpec((C, 1), lambda g: (0, 0)),      # b1
                    pl.BlockSpec((D2, C), lambda g: (0, 0)),     # w2 fused
                    pl.BlockSpec((D2, 1), lambda g: (0, 0)),     # b2 fused
                ],
                out_specs=pl.BlockSpec((D2, nt), lambda g: (0, g)),
            ),
            compiler_params=pltpu.CompilerParams(
                dimension_semantics=("parallel",),
                vmem_limit_bytes=vmem_limit,
            ),
        )(x_flat, w1, b1, w2, b2)
        # (2D, B*G) -> (2, D, B', 12, G) -> (B', 2, G, 12, D)
        y = y_flat.reshape(2, D, Bp, num_angle, G).transpose(2, 0, 4, 3, 1)
    else:
        # Main path: NCL layout consumed directly (no host transpose), grid over
        # (B, G tiles). Ragged G handled by cdiv + masked boundary tile (each
        # output column depends only on its own input column, so padding is safe).
        gt = _pick_lane_tile(G, max_g_tile)
        grid = (B, pl.cdiv(G, gt))
        # TODO(synk): if profiling on v5e shows exposed input DMA, add
        # pipeline_mode=pl.Buffered(3) on the x BlockSpec.
        y_raw = pl.pallas_call(
            _swad_kernel,
            out_shape=jax.ShapeDtypeStruct((B, D2, G), out_dtype),
            grid_spec=pltpu.PrefetchScalarGridSpec(
                num_scalar_prefetch=0,
                grid=grid,
                in_specs=[
                    pl.BlockSpec((None, C, gt), lambda b, g: (b, 0, g)),  # x (NCL, f32)
                    pl.BlockSpec((C, C), lambda b, g: (0, 0)),            # w1 (resident)
                    pl.BlockSpec((C, 1), lambda b, g: (0, 0)),            # b1
                    pl.BlockSpec((D2, C), lambda b, g: (0, 0)),           # w2 fused
                    pl.BlockSpec((D2, 1), lambda b, g: (0, 0)),           # b2 fused
                ],
                out_specs=pl.BlockSpec((None, D2, gt), lambda b, g: (b, 0, g)),
            ),
            compiler_params=pltpu.CompilerParams(
                dimension_semantics=("parallel", "parallel"),
                vmem_limit_bytes=vmem_limit,
            ),
        )(vp_features, w1, b1, w2, b2)
        # (B, 2D, G) -> (B', 12, 2, D, G) -> (B', 2, G, 12, D)  (exactly the
        # PyTorch view(-1,12,2,D,G).permute(0,2,4,1,3), done once).
        y = y_raw.reshape(Bp, num_angle, 2, D, G).transpose(0, 2, 4, 1, 3)

    return {"grasp_score_pred": y[:, 0], "grasp_width_pred": y[:, 1]}


def init_params(key, num_depth):
    """Deterministic init matching Conv1d(128,128,1) / Conv1d(128,2D,1).

    Weights stored in PyTorch (out, in) layout (kernel-size-1 squeezed).
    """
    k1, k2, k3, k4 = jax.random.split(key, 4)
    c_in = 128
    n2 = 2 * num_depth
    s1 = 1.0 / jnp.sqrt(c_in)
    w1 = jax.random.uniform(k1, (c_in, c_in), jnp.float32, -s1, s1)   # (out, in)
    b1 = jax.random.uniform(k2, (c_in,), jnp.float32, -s1, s1)
    w2 = jax.random.uniform(k3, (n2, c_in), jnp.float32, -s1, s1)     # (out, in)
    b2 = jax.random.uniform(k4, (n2,), jnp.float32, -s1, s1)
    return {"w1": w1, "b1": b1, "w2": w2, "b2": b2}


def _reference(vp_features, params, num_angle, num_depth):
    # Pure-JAX f32 reference of the PyTorch forward (for a sanity check).
    w1, b1, w2, b2 = params["w1"], params["b1"], params["w2"], params["b2"]
    B, C, G = vp_features.shape
    h = jnp.einsum("oc,bcg->bog", w1, vp_features) + b1[None, :, None]
    h = jnp.maximum(h, 0.0)
    y = jnp.einsum("oc,bcg->bog", w2, h) + b2[None, :, None]          # (B, 2D, G)
    y = y.reshape(B // num_angle, num_angle, 2, num_depth, G)
    y = jnp.transpose(y, (0, 2, 4, 1, 3))                             # (B', 2, G, 12, D)
    return {"grasp_score_pred": y[:, 0], "grasp_width_pred": y[:, 1]}


def _check(out, ref, shape):
    for k in ("grasp_score_pred", "grasp_width_pred"):
        assert out[k].shape == shape, (k, out[k].shape, shape)
        # bf16 compute / f32 accumulation -> small drift vs f32 reference.
        assert jnp.allclose(out[k], ref[k], atol=3e-2, rtol=3e-2), (
            k, float(jnp.max(jnp.abs(out[k] - ref[k]))))


if __name__ == "__main__":
    num_angle, num_depth = 12, 4
    key = jax.random.PRNGKey(0)
    kx1, kx2, kp = jax.random.split(key, 3)
    params = init_params(kp, num_depth)

    # Test 1: small-G deployment shape -> flattened (C, B*G) lane-dense path.
    Bp, G = 2, 16
    B = Bp * num_angle
    x1 = jax.random.normal(kx1, (B, 128, G), jnp.float32)
    out1 = swadnet_dea_forward(x1, params, num_angle, num_depth)
    jax.block_until_ready(out1)
    _check(out1, _reference(x1, params, num_angle, num_depth),
           (Bp, G, num_angle, num_depth))

    # Test 2: batched NCL path with multiple G tiles and a ragged last tile
    # (exercises the cdiv grid; small_g_threshold=0 forces the main path).
    Bp2, G2 = 1, 320
    B2 = Bp2 * num_angle
    x2 = jax.random.normal(kx2, (B2, 128, G2), jnp.float32)
    out2 = swadnet_dea_forward(x2, params, num_angle, num_depth,
                               small_g_threshold=0, max_g_tile=128)
    jax.block_until_ready(out2)
    _check(out2, _reference(x2, params, num_angle, num_depth),
           (Bp2, G2, num_angle, num_depth))

    print("KERNEL_OK")
</pallas_src>

<mosaic_0001>
module attributes {stable_mosaic.version = 11 : i64} {
  func.func @_swad_kernel(%arg0: i32, %arg1: memref<128x384xf32, #tpu.memory_space<vmem>>, %arg2: memref<128x128xbf16, #tpu.memory_space<vmem>>, %arg3: memref<128x1xf32, #tpu.memory_space<vmem>>, %arg4: memref<8x128xbf16, #tpu.memory_space<vmem>>, %arg5: memref<8x1xf32, #tpu.memory_space<vmem>>, %arg6: memref<8x384xf32, #tpu.memory_space<vmem>>) attributes {dimension_semantics = [#tpu.dimension_semantics<parallel>], iteration_bounds = array<i64: 1>, scalar_prefetch = 0 : i64, scratch_operands = 0 : i64, tpu.core_type = #tpu.core_type<tc>, window_params = [{transform_indices = @transform_0, window_bounds = array<i64: 128, 384>}, {pipeline_mode = #tpu.pipeline_mode<synchronous>, transform_indices = @transform_1, window_bounds = array<i64: 128, 128>}, {pipeline_mode = #tpu.pipeline_mode<synchronous>, transform_indices = @transform_2, window_bounds = array<i64: 128, 1>}, {pipeline_mode = #tpu.pipeline_mode<synchronous>, transform_indices = @transform_3, window_bounds = array<i64: 8, 128>}, {pipeline_mode = #tpu.pipeline_mode<synchronous>, transform_indices = @transform_4, window_bounds = array<i64: 8, 1>}, {transform_indices = @transform_5, window_bounds = array<i64: 8, 384>}]} {
    %c0 = arith.constant 0 : index
    %c0_0 = arith.constant 0 : index
    %0 = vector.load %arg1[%c0, %c0_0] : memref<128x384xf32, #tpu.memory_space<vmem>>, vector<128x384xf32>
    %1 = arith.truncf %0 : vector<128x384xf32> to vector<128x384xbf16>
    %c0_1 = arith.constant 0 : index
    %c0_2 = arith.constant 0 : index
    %2 = vector.load %arg2[%c0_1, %c0_2] : memref<128x128xbf16, #tpu.memory_space<vmem>>, vector<128x128xbf16>
    %cst = arith.constant dense<0.000000e+00> : vector<128x384xf32>
    %3 = tpu.matmul %2, %1, %cst {dimension_numbers = #tpu.dot_dimension_numbers<[1], [0], [0], [1], [0, 0, 1, 1], [], []>} : vector<128x128xbf16>, vector<128x384xbf16>, vector<128x384xf32> -> vector<128x384xf32>
    %c0_3 = arith.constant 0 : index
    %c0_4 = arith.constant 0 : index
    %4 = vector.load %arg3[%c0_3, %c0_4] : memref<128x1xf32, #tpu.memory_space<vmem>>, vector<128x1xf32>
    %5 = vector.broadcast %4 : vector<128x1xf32> to vector<128x384xf32>
    %6 = arith.addf %3, %5 : vector<128x384xf32>
    %cst_5 = arith.constant 0.000000e+00 : f32
    %7 = vector.broadcast %cst_5 : f32 to vector<128x384xf32>
    %8 = arith.maximumf %6, %7 : vector<128x384xf32>
    %9 = arith.truncf %8 : vector<128x384xf32> to vector<128x384xbf16>
    %c0_6 = arith.constant 0 : index
    %c0_7 = arith.constant 0 : index
    %10 = vector.load %arg4[%c0_6, %c0_7] : memref<8x128xbf16, #tpu.memory_space<vmem>>, vector<8x128xbf16>
    %cst_8 = arith.constant dense<0.000000e+00> : vector<8x384xf32>
    %11 = tpu.matmul %10, %9, %cst_8 {dimension_numbers = #tpu.dot_dimension_numbers<[1], [0], [0], [1], [0, 0, 1, 1], [], []>} : vector<8x128xbf16>, vector<128x384xbf16>, vector<8x384xf32> -> vector<8x384xf32>
    %c0_9 = arith.constant 0 : index
    %c0_10 = arith.constant 0 : index
    %12 = vector.load %arg5[%c0_9, %c0_10] : memref<8x1xf32, #tpu.memory_space<vmem>>, vector<8x1xf32>
    %13 = vector.broadcast %12 : vector<8x1xf32> to vector<8x384xf32>
    %14 = arith.addf %11, %13 : vector<8x384xf32>
    %c0_11 = arith.constant 0 : index
    %c0_12 = arith.constant 0 : index
    %15 = vector.load %arg6[%c0_11, %c0_12] : memref<8x384xf32, #tpu.memory_space<vmem>>, vector<8x384xf32>
    tpu.vector_store %arg6[%c0_11, %c0_12], %14 {strides = array<i32>} : memref<8x384xf32, #tpu.memory_space<vmem>>, vector<8x384xf32>,
    return
  }
  func.func @transform_0(%arg0: i32) -> (i32, i32) {
    %c0_i32 = arith.constant 0 : i32
    %c0_i32_0 = arith.constant 0 : i32
    return %c0_i32, %arg0 : i32, i32
  }
  func.func @transform_1(%arg0: i32) -> (i32, i32) {
    %c0_i32 = arith.constant 0 : i32
    %c0_i32_0 = arith.constant 0 : i32
    %c0_i32_1 = arith.constant 0 : i32
    return %c0_i32, %c0_i32_0 : i32, i32
  }
  func.func @transform_2(%arg0: i32) -> (i32, i32) {
    %c0_i32 = arith.constant 0 : i32
    %c0_i32_0 = arith.constant 0 : i32
    %c0_i32_1 = arith.constant 0 : i32
    return %c0_i32, %c0_i32_0 : i32, i32
  }
  func.func @transform_3(%arg0: i32) -> (i32, i32) {
    %c0_i32 = arith.constant 0 : i32
    %c0_i32_0 = arith.constant 0 : i32
    %c0_i32_1 = arith.constant 0 : i32
    return %c0_i32, %c0_i32_0 : i32, i32
  }
  func.func @transform_4(%arg0: i32) -> (i32, i32) {
    %c0_i32 = arith.constant 0 : i32
    %c0_i32_0 = arith.constant 0 : i32
    %c0_i32_1 = arith.constant 0 : i32
    return %c0_i32, %c0_i32_0 : i32, i32
  }
  func.func @transform_5(%arg0: i32) -> (i32, i32) {
    %c0_i32 = arith.constant 0 : i32
    %c0_i32_0 = arith.constant 0 : i32
    return %c0_i32, %arg0 : i32, i32
  }
}

</mosaic_0001>

<llo_original>
// kernel: tpu_custom_call.1
$region0: #{tpu_custom_call.1}
  #allocation0 [shape = 'u32[]', space=smem, size = 0x4, offset = 0x4, fixed_abs, tag = 'smem constant byte address 0x4 - core index']
  #allocation1 [shape = 'u32[144,128]{1,0:T(1,128)}', space=vmem, size = 0x12000, scoped, tag = 'internal scratch']
  %s0 = inlined_call_operand.hbm [shape: f32[128,384], index: 0, kind: input, shape index: {}]
  %s1 = inlined_call_operand.vmem [shape: bf16[128,128], index: 1, kind: input, shape index: {}]
  %s2 = inlined_call_operand.vmem [shape: f32[128,1], index: 2, kind: input, shape index: {}]
  %s3 = inlined_call_operand.vmem [shape: bf16[8,128], index: 3, kind: input, shape index: {}]
  %s4 = inlined_call_operand.vmem [shape: f32[8,1], index: 4, kind: input, shape index: {}]
  %s5 = inlined_call_operand.hbm [shape: f32[8,384], index: 5, kind: output, shape index: {}]
  %s6 = sld [smem:[#allocation0]]
  $region34: #{tpu_custom_call.1} parent=0
    _
  %s8 = ssub.s32 1, %s6
  %s9 = scalar_select 0, %s8, %s6
  $region1: #{tpu_custom_call.1} parent=0
    #allocation2 [shape = 'u8[196608]{0}', space=vmem, size = 0x30000, scoped, tag = 'input window, operand 0, single buffered']
    #allocation3 [shape = 's32[1]{0}', space=sflag, size = 0x4, scoped, tag = 'scoped memory for tpu_custom_call.1']
    #allocation4 [shape = 's32[1]{0}', space=sflag, size = 0x4, scoped, tag = 'scoped memory for tpu_custom_call.1']
    #allocation5 [shape = 'u8[12288]{0}', space=vmem, size = 0x3000, scoped, tag = 'output window, operand 0, single buffered']
    %10 = vsyncpa [#allocation3], 0
    %11 = vsyncpa [#allocation4], 0
    // Predicated region
    $region2: #{tpu_custom_call.1} parent=1 // pred_check
      _
    $region3: #{tpu_custom_call.1} parent=1 // pred_check_branch
      %13 = sbr.rel (0) target = $region5
    $region4: #{tpu_custom_call.1} parent=1 // pred_region
      %s15 = ssub.s32 6144, 6144
      %16 = vsyncadd [#allocation3], %s15
      %s17 = sshll.u32 [#allocation2], 4
      %s18 = int_to_ptr.vmem [resolvable:$true] %s17
      %23 = dma.hbm_to_vmem [thread:$0]  %s0, 6144, %s18, [#allocation3], 384, 384, 24
    $region5: #{tpu_custom_call.1} parent=1 // pred_fallthru
      _
    // Predicated region
    $region6: #{tpu_custom_call.1} parent=1 // pred_check
      _
    $region7: #{tpu_custom_call.1} parent=1 // pred_check_branch
      %25 = sbr.rel (0) target = $region9
    $region8: #{tpu_custom_call.1} parent=1 // pred_region
      _
    $region9: #{tpu_custom_call.1} parent=1 // pred_fallthru
      _
    // Predicated region
    $region10: #{tpu_custom_call.1} parent=1 // pred_check
      _
    $region11: #{tpu_custom_call.1} parent=1 // pred_check_branch
      %27 = sbr.rel (0) target = $region13
    $region12: #{tpu_custom_call.1} parent=1 // pred_region
      _
    $region13: #{tpu_custom_call.1} parent=1 // pred_fallthru
      _
    // Predicated region
    $region14: #{tpu_custom_call.1} parent=1 // pred_check
      _
    $region15: #{tpu_custom_call.1} parent=1 // pred_check_branch
      %29 = sbr.rel (0) target = $region17
    $region16: #{tpu_custom_call.1} parent=1 // pred_region
      _
    $region17: #{tpu_custom_call.1} parent=1 // pred_fallthru
      _
    // Predicated region
    $region18: #{tpu_custom_call.1} parent=1 // pred_check
      _
    $region19: #{tpu_custom_call.1} parent=1 // pred_check_branch
      %31 = sbr.rel (0) target = $region21
    $region20: #{tpu_custom_call.1} parent=1 // pred_region
      _
    $region21: #{tpu_custom_call.1} parent=1 // pred_fallthru
      _
    // Predicated region
    $region22: #{tpu_custom_call.1} parent=1 // pred_check
      _
    $region23: #{tpu_custom_call.1} parent=1 // pred_check_branch
      %33 = sbr.rel (0) target = $region25
    $region24: #{tpu_custom_call.1} parent=1 // pred_region
      %34 = dma.done [#allocation3], 6144
    $region25: #{tpu_custom_call.1} parent=1 // pred_fallthru
      _
    %v36 = vld [vmem:[#allocation2] sm:$0xff]
    %v37 = vld [vmem:[#allocation2 + $0x8] sm:$0xff]
    %v38 = vld [vmem:[#allocation2 + $0x10] sm:$0xff]
    %v39 = vld [vmem:[#allocation2 + $0x18] sm:$0xff]
    %v40 = vld [vmem:[#allocation2 + $0x20] sm:$0xff]
    %v41 = vld [vmem:[#allocation2 + $0x28] sm:$0xff]
    %v42 = vld [vmem:[#allocation2 + $0x30] sm:$0xff]
    %v43 = vld [vmem:[#allocation2 + $0x38] sm:$0xff]
    %v44 = vld [vmem:[#allocation2 + $0x40] sm:$0xff]
    %v45 = vld [vmem:[#allocation2 + $0x48] sm:$0xff]
    %v46 = vld [vmem:[#allocation2 + $0x50] sm:$0xff]
    %v47 = vld [vmem:[#allocation2 + $0x58] sm:$0xff]
    %v48 = vld [vmem:[#allocation2 + $0x60] sm:$0xff]
    %v49 = vld [vmem:[#allocation2 + $0x68] sm:$0xff]
    %v50 = vld [vmem:[#allocation2 + $0x70] sm:$0xff]
    %v51 = vld [vmem:[#allocation2 + $0x78] sm:$0xff]
    %v52 = vld [vmem:[#allocation2 + $0x80] sm:$0xff]
    %v53 = vld [vmem:[#allocation2 + $0x88] sm:$0xff]
    %v54 = vld [vmem:[#allocation2 + $0x90] sm:$0xff]
    %v55 = vld [vmem:[#allocation2 + $0x98] sm:$0xff]
    %v56 = vld [vmem:[#allocation2 + $0xa0] sm:$0xff]
    %v57 = vld [vmem:[#allocation2 + $0xa8] sm:$0xff]
    %v58 = vld [vmem:[#allocation2 + $0xb0] sm:$0xff]
    %v59 = vld [vmem:[#allocation2 + $0xb8] sm:$0xff]
    %v60 = vld [vmem:[#allocation2 + $0xc0] sm:$0xff]
    %v61 = vld [vmem:[#allocation2 + $0xc8] sm:$0xff]
    %v62 = vld [vmem:[#allocation2 + $0xd0] sm:$0xff]
    %v63 = vld [vmem:[#allocation2 + $0xd8] sm:$0xff]
    %v64 = vld [vmem:[#allocation2 + $0xe0] sm:$0xff]
    %v65 = vld [vmem:[#allocation2 + $0xe8] sm:$0xff]
    %v66 = vld [vmem:[#allocation2 + $0xf0] sm:$0xff]
    %v67 = vld [vmem:[#allocation2 + $0xf8] sm:$0xff]
    %v68 = vld [vmem:[#allocation2 + $0x100] sm:$0xff]
    %v69 = vld [vmem:[#allocation2 + $0x108] sm:$0xff]
    %v70 = vld [vmem:[#allocation2 + $0x110] sm:$0xff]
    %v71 = vld [vmem:[#allocation2 + $0x118] sm:$0xff]
    %v72 = vld [vmem:[#allocation2 + $0x120] sm:$0xff]
    %v73 = vld [vmem:[#allocation2 + $0x128] sm:$0xff]
    %v74 = vld [vmem:[#allocation2 + $0x130] sm:$0xff]
    %v75 = vld [vmem:[#allocation2 + $0x138] sm:$0xff]
    %v76 = vld [vmem:[#allocation2 + $0x140] sm:$0xff]
    %v77 = vld [vmem:[#allocation2 + $0x148] sm:$0xff]
    %v78 = vld [vmem:[#allocation2 + $0x150] sm:$0xff]
    %v79 = vld [vmem:[#allocation2 + $0x158] sm:$0xff]
    %v80 = vld [vmem:[#allocation2 + $0x160] sm:$0xff]
    %v81 = vld [vmem:[#allocation2 + $0x168] sm:$0xff]
    %v82 = vld [vmem:[#allocation2 + $0x170] sm:$0xff]
    %v83 = vld [vmem:[#allocation2 + $0x178] sm:$0xff]
    %v84 = vpack.c.bf16 %v39, %v36
    %v85 = vpack.c.bf16 %v40, %v37
    %v86 = vpack.c.bf16 %v41, %v38
    %v87 = vpack.c.bf16 %v45, %v42
    %v88 = vpack.c.bf16 %v46, %v43
    %v89 = vpack.c.bf16 %v47, %v44
    %v90 = vpack.c.bf16 %v51, %v48
    %v91 = vpack.c.bf16 %v52, %v49
    %v92 = vpack.c.bf16 %v53, %v50
    %v93 = vpack.c.bf16 %v57, %v54
    %v94 = vpack.c.bf16 %v58, %v55
    %v95 = vpack.c.bf16 %v59, %v56
    %v96 = vpack.c.bf16 %v63, %v60
    %v97 = vpack.c.bf16 %v64, %v61
    %v98 = vpack.c.bf16 %v65, %v62
    %v99 = vpack.c.bf16 %v69, %v66
    %v100 = vpack.c.bf16 %v70, %v67
    %v101 = vpack.c.bf16 %v71, %v68
    %v102 = vpack.c.bf16 %v75, %v72
    %v103 = vpack.c.bf16 %v76, %v73
    %v104 = vpack.c.bf16 %v77, %v74
    %v105 = vpack.c.bf16 %v81, %v78
    %v106 = vpack.c.bf16 %v82, %v79
    %v107 = vpack.c.bf16 %v83, %v80
    %v108 = vld [vmem:[%s1] sm:$0xf]
    %v109 = vld [vmem:[%s1 + $0x4] sm:$0xf]
    %v110 = vld [vmem:[%s1 + $0x8] sm:$0xf]
    %v111 = vld [vmem:[%s1 + $0xc] sm:$0xf]
    %v112 = vld [vmem:[%s1 + $0x10] sm:$0xf]
    %v113 = vld [vmem:[%s1 + $0x14] sm:$0xf]
    %v114 = vld [vmem:[%s1 + $0x18] sm:$0xf]
    %v115 = vld [vmem:[%s1 + $0x1c] sm:$0xf]
    %v116 = vld [vmem:[%s1 + $0x20] sm:$0xf]
    %v117 = vld [vmem:[%s1 + $0x24] sm:$0xf]
    %v118 = vld [vmem:[%s1 + $0x28] sm:$0xf]
    %v119 = vld [vmem:[%s1 + $0x2c] sm:$0xf]
    %v120 = vld [vmem:[%s1 + $0x30] sm:$0xf]
    %v121 = vld [vmem:[%s1 + $0x34] sm:$0xf]
    %v122 = vld [vmem:[%s1 + $0x38] sm:$0xf]
    %v123 = vld [vmem:[%s1 + $0x3c] sm:$0xf]
    %v124 = vld [vmem:[%s2] sm:$0xff]
    %v125 = vld [vmem:[%s2 + $0x8] sm:$0xff]
    %v126 = vld [vmem:[%s2 + $0x10] sm:$0xff]
    %v127 = vld [vmem:[%s2 + $0x18] sm:$0xff]
    %v128 = vld [vmem:[%s2 + $0x20] sm:$0xff]
    %v129 = vld [vmem:[%s2 + $0x28] sm:$0xff]
    %v130 = vld [vmem:[%s2 + $0x30] sm:$0xff]
    %v131 = vld [vmem:[%s2 + $0x38] sm:$0xff]
    %v132 = vld [vmem:[%s2 + $0x40] sm:$0xff]
    %v133 = vld [vmem:[%s2 + $0x48] sm:$0xff]
    %v134 = vld [vmem:[%s2 + $0x50] sm:$0xff]
    %v135 = vld [vmem:[%s2 + $0x58] sm:$0xff]
    %v136 = vld [vmem:[%s2 + $0x60] sm:$0xff]
    %v137 = vld [vmem:[%s2 + $0x68] sm:$0xff]
    %v138 = vld [vmem:[%s2 + $0x70] sm:$0xff]
    %v139 = vld [vmem:[%s2 + $0x78] sm:$0xff]
    %141 = vset.pattern.permute.xlu0 0
    %142 = vperm.xlu0 %141, %v124
    %v143 = vpop.permute.xlu0 %142
    %146 = vset.pattern.permute.xlu0 0
    %147 = vperm.xlu0 %146, %v125
    %v148 = vpop.permute.xlu0 %147
    %151 = vset.pattern.permute.xlu0 0
    %152 = vperm.xlu0 %151, %v126
    %v153 = vpop.permute.xlu0 %152
    %156 = vset.pattern.permute.xlu0 0
    %157 = vperm.xlu0 %156, %v127
    %v158 = vpop.permute.xlu0 %157
    %161 = vset.pattern.permute.xlu0 0
    %162 = vperm.xlu0 %161, %v128
    %v163 = vpop.permute.xlu0 %162
    %166 = vset.pattern.permute.xlu0 0
    %167 = vperm.xlu0 %166, %v129
    %v168 = vpop.permute.xlu0 %167
    %171 = vset.pattern.permute.xlu0 0
    %172 = vperm.xlu0 %171, %v130
    %v173 = vpop.permute.xlu0 %172
    %176 = vset.pattern.permute.xlu0 0
    %177 = vperm.xlu0 %176, %v131
    %v178 = vpop.permute.xlu0 %177
    %181 = vset.pattern.permute.xlu0 0
    %182 = vperm.xlu0 %181, %v132
    %v183 = vpop.permute.xlu0 %182
    %186 = vset.pattern.permute.xlu0 0
    %187 = vperm.xlu0 %186, %v133
    %v188 = vpop.permute.xlu0 %187
    %191 = vset.pattern.permute.xlu0 0
    %192 = vperm.xlu0 %191, %v134
    %v193 = vpop.permute.xlu0 %192
    %196 = vset.pattern.permute.xlu0 0
    %197 = vperm.xlu0 %196, %v135
    %v198 = vpop.permute.xlu0 %197
    %201 = vset.pattern.permute.xlu0 0
    %202 = vperm.xlu0 %201, %v136
    %v203 = vpop.permute.xlu0 %202
    %206 = vset.pattern.permute.xlu0 0
    %207 = vperm.xlu0 %206, %v137
    %v208 = vpop.permute.xlu0 %207
    %211 = vset.pattern.permute.xlu0 0
    %212 = vperm.xlu0 %211, %v138
    %v213 = vpop.permute.xlu0 %212
    %216 = vset.pattern.permute.xlu0 0
    %217 = vperm.xlu0 %216, %v139
    %v218 = vpop.permute.xlu0 %217
    %v236 = vunpack.c.l.b16 %v108
    %v237 = vunpack.c.l.b16 %v109
    %v238 = vunpack.c.l.b16 %v110
    %v239 = vunpack.c.l.b16 %v111
    %v240 = vunpack.c.l.b16 %v112
    %v241 = vunpack.c.l.b16 %v113
    %v242 = vunpack.c.l.b16 %v114
    %v243 = vunpack.c.l.b16 %v115
    %v244 = vunpack.c.l.b16 %v116
    %v245 = vunpack.c.l.b16 %v117
    %v246 = vunpack.c.l.b16 %v118
    %v247 = vunpack.c.l.b16 %v119
    %v248 = vunpack.c.l.b16 %v120
    %v249 = vunpack.c.l.b16 %v121
    %v250 = vunpack.c.l.b16 %v122
    %v251 = vunpack.c.l.b16 %v123
    %v252 = vpack.c.b16 %v237, %v236
    %v253 = vpack.c.b16 %v239, %v238
    %v254 = vpack.c.b16 %v241, %v240
    %v255 = vpack.c.b16 %v243, %v242
    %v256 = vpack.c.b16 %v245, %v244
    %v257 = vpack.c.b16 %v247, %v246
    %v258 = vpack.c.b16 %v249, %v248
    %v259 = vpack.c.b16 %v251, %v250
    %268 = vmatprep.subr.bf16.mxu0 %v106
    %269 = vmatpush1.bf16.msra.mxu0 %v105
    %270 = vmatprep.subr.bf16.mxu0 %v103
    %271 = vmatpush1.bf16.msra.mxu0 %v102
    %272 = vmatprep.subr.bf16.mxu0 %v100
    %273 = vmatpush1.bf16.msra.mxu0 %v99
    %274 = vmatprep.subr.bf16.mxu0 %v97
    %275 = vmatpush1.bf16.msra.mxu0 %v96
    %276 = vmatprep.subr.bf16.mxu0 %v94
    %277 = vmatpush1.bf16.msra.mxu0 %v93
    %278 = vmatprep.subr.bf16.mxu0 %v91
    %279 = vmatpush1.bf16.msra.mxu0 %v90
    %280 = vmatprep.subr.bf16.mxu0 %v88
    %281 = vmatpush1.bf16.msra.mxu0 %v87
    %282 = vmatprep.subr.bf16.mxu0 %v85
    %283 = vmatpush1.bf16.msra.mxu0 %v84
    %284 = vmatprep.subr.bf16.mxu0 0
    %285 = vmatpush2.bf16.msra.mxu0 0
    %286 = vmatprep.subr.bf16.mxu0 0
    %287 = vmatpush2.bf16.msra.mxu0 0
    %288 = vmatprep.subr.bf16.mxu0 0
    %289 = vmatpush2.bf16.msra.mxu0 0
    %290 = vmatprep.subr.bf16.mxu0 0
    %291 = vmatpush2.bf16.msra.mxu0 0
    %292 = vmatprep.subr.bf16.mxu0 0
    %293 = vmatpush2.bf16.msra.mxu0 0
    %294 = vmatprep.subr.bf16.mxu0 0
    %295 = vmatpush2.bf16.msra.mxu0 0
    %296 = vmatprep.subr.bf16.mxu0 0
    %297 = vmatpush2.bf16.msra.mxu0 0
    %298 = vmatprep.subr.bf16.mxu0 0
    %299 = vmatpush2.bf16.msra.mxu0 0
    %300 = vmatprep.mubr.bf16.mxu0 0
    %301 = vmatmul.mubr.bf16.gmra.mxu0 %v252
    %v302 = vpop.f32.mrf.mxu0
    %v303 = vadd.f32 %v143, %v302
    %v304 = vpop.f32.mrf.mxu0
    %v305 = vadd.f32 %v143, %v304
    %v306 = vpop.f32.mrf.mxu0
    %v307 = vadd.f32 %v148, %v306
    %v308 = vpop.f32.mrf.mxu0
    %v309 = vadd.f32 %v148, %v308
    %310 = vmatprep.mubr.bf16.mxu0 0
    %311 = vmatmul.mubr.bf16.gmra.mxu0 %v253
    %v312 = vpop.f32.mrf.mxu0
    %v313 = vadd.f32 %v153, %v312
    %v314 = vpop.f32.mrf.mxu0
    %v315 = vadd.f32 %v153, %v314
    %v316 = vpop.f32.mrf.mxu0
    %v317 = vadd.f32 %v158, %v316
    %v318 = vpop.f32.mrf.mxu0
    %v319 = vadd.f32 %v158, %v318
    %320 = vmatprep.mubr.bf16.mxu0 0
    %321 = vmatmul.mubr.bf16.gmra.mxu0 %v254
    %v322 = vpop.f32.mrf.mxu0
    %v323 = vadd.f32 %v163, %v322
    %v324 = vpop.f32.mrf.mxu0
    %v325 = vadd.f32 %v163, %v324
    %v326 = vpop.f32.mrf.mxu0
    %v327 = vadd.f32 %v168, %v326
    %v328 = vpop.f32.mrf.mxu0
    %v329 = vadd.f32 %v168, %v328
    %330 = vmatprep.mubr.bf16.mxu0 0
    %331 = vmatmul.mubr.bf16.gmra.mxu0 %v255
    %v332 = vpop.f32.mrf.mxu0
    %v333 = vadd.f32 %v173, %v332
    %v334 = vpop.f32.mrf.mxu0
    %v335 = vadd.f32 %v173, %v334
    %v336 = vpop.f32.mrf.mxu0
    %v337 = vadd.f32 %v178, %v336
    %v338 = vpop.f32.mrf.mxu0
    %v339 = vadd.f32 %v178, %v338
    %340 = vmatprep.mubr.bf16.mxu0 0
    %341 = vmatmul.mubr.bf16.gmra.mxu0 %v256
    %v342 = vpop.f32.mrf.mxu0
    %v343 = vadd.f32 %v183, %v342
    %v344 = vpop.f32.mrf.mxu0
    %v345 = vadd.f32 %v183, %v344
    %v346 = vpop.f32.mrf.mxu0
    %v347 = vadd.f32 %v188, %v346
    %v348 = vpop.f32.mrf.mxu0
    %v349 = vadd.f32 %v188, %v348
    %350 = vmatprep.mubr.bf16.mxu0 0
    %351 = vmatmul.mubr.bf16.gmra.mxu0 %v257
    %v352 = vpop.f32.mrf.mxu0
    %v353 = vadd.f32 %v193, %v352
    %v354 = vpop.f32.mrf.mxu0
    %v355 = vadd.f32 %v193, %v354
    %v356 = vpop.f32.mrf.mxu0
    %v357 = vadd.f32 %v198, %v356
    %v358 = vpop.f32.mrf.mxu0
    %v359 = vadd.f32 %v198, %v358
    %360 = vmatprep.mubr.bf16.mxu0 0
    %361 = vmatmul.mubr.bf16.gmra.mxu0 %v258
    %v362 = vpop.f32.mrf.mxu0
    %v363 = vadd.f32 %v203, %v362
    %v364 = vpop.f32.mrf.mxu0
    %v365 = vadd.f32 %v203, %v364
    %v366 = vpop.f32.mrf.mxu0
    %v367 = vadd.f32 %v208, %v366
    %v368 = vpop.f32.mrf.mxu0
    %v369 = vadd.f32 %v208, %v368
    %370 = vmatprep.mubr.bf16.mxu0 0
    %371 = vmatmul.mubr.bf16.gmra.mxu0 %v259
    %v372 = vpop.f32.mrf.mxu0
    %v373 = vadd.f32 %v213, %v372
    %v374 = vpop.f32.mrf.mxu0
    %v375 = vadd.f32 %v213, %v374
    %v376 = vpop.f32.mrf.mxu0
    %v377 = vadd.f32 %v218, %v376
    %v378 = vpop.f32.mrf.mxu0
    %v379 = vadd.f32 %v218, %v378
    %380 = vdwg.mxu0
    %381 = vmatprep.subr.bf16.mxu0 0
    %382 = vmatpush1.bf16.msra.mxu0 %v107
    %383 = vmatprep.subr.bf16.mxu0 0
    %384 = vmatpush1.bf16.msra.mxu0 %v104
    %385 = vmatprep.subr.bf16.mxu0 0
    %386 = vmatpush1.bf16.msra.mxu0 %v101
    %387 = vmatprep.subr.bf16.mxu0 0
    %388 = vmatpush1.bf16.msra.mxu0 %v98
    %389 = vmatprep.subr.bf16.mxu0 0
    %390 = vmatpush1.bf16.msra.mxu0 %v95
    %391 = vmatprep.subr.bf16.mxu0 0
    %392 = vmatpush1.bf16.msra.mxu0 %v92
    %393 = vmatprep.subr.bf16.mxu0 0
    %394 = vmatpush1.bf16.msra.mxu0 %v89
    %395 = vmatprep.subr.bf16.mxu0 0
    %396 = vmatpush1.bf16.msra.mxu0 %v86
    %397 = vmatprep.subr.bf16.mxu0 0
    %398 = vmatpush2.bf16.msra.mxu0 0
    %399 = vmatprep.subr.bf16.mxu0 0
    %400 = vmatpush2.bf16.msra.mxu0 0
    %401 = vmatprep.subr.bf16.mxu0 0
    %402 = vmatpush2.bf16.msra.mxu0 0
    %403 = vmatprep.subr.bf16.mxu0 0
    %404 = vmatpush2.bf16.msra.mxu0 0
    %405 = vmatprep.subr.bf16.mxu0 0
    %406 = vmatpush2.bf16.msra.mxu0 0
    %407 = vmatprep.subr.bf16.mxu0 0
    %408 = vmatpush2.bf16.msra.mxu0 0
    %409 = vmatprep.subr.bf16.mxu0 0
    %410 = vmatpush2.bf16.msra.mxu0 0
    %411 = vmatprep.subr.bf16.mxu0 0
    %412 = vmatpush2.bf16.msra.mxu0 0
    %413 = vmatprep.mubr.bf16.mxu0 0
    %414 = vmatmul.mubr.bf16.gmra.mxu0 %v252
    %v415 = vpop.f32.mrf.mxu0
    %v416 = vadd.f32 %v143, %v415
    %v417 = vpop.f32.mrf.mxu0
    %v418 = vpop.f32.mrf.mxu0
    %v419 = vadd.f32 %v148, %v418
    %v420 = vpop.f32.mrf.mxu0
    %421 = vmatprep.mubr.bf16.mxu0 0
    %422 = vmatmul.mubr.bf16.gmra.mxu0 %v253
    %v423 = vpop.f32.mrf.mxu0
    %v424 = vadd.f32 %v153, %v423
    %v425 = vpop.f32.mrf.mxu0
    %v426 = vpop.f32.mrf.mxu0
    %v427 = vadd.f32 %v158, %v426
    %v428 = vpop.f32.mrf.mxu0
    %429 = vmatprep.mubr.bf16.mxu0 0
    %430 = vmatmul.mubr.bf16.gmra.mxu0 %v254
    %v431 = vpop.f32.mrf.mxu0
    %v432 = vadd.f32 %v163, %v431
    %v433 = vpop.f32.mrf.mxu0
    %v434 = vpop.f32.mrf.mxu0
    %v435 = vadd.f32 %v168, %v434
    %v436 = vpop.f32.mrf.mxu0
    %437 = vmatprep.mubr.bf16.mxu0 0
    %438 = vmatmul.mubr.bf16.gmra.mxu0 %v255
    %v439 = vpop.f32.mrf.mxu0
    %v440 = vadd.f32 %v173, %v439
    %v441 = vpop.f32.mrf.mxu0
    %v442 = vpop.f32.mrf.mxu0
    %v443 = vadd.f32 %v178, %v442
    %v444 = vpop.f32.mrf.mxu0
    %445 = vmatprep.mubr.bf16.mxu0 0
    %446 = vmatmul.mubr.bf16.gmra.mxu0 %v256
    %v447 = vpop.f32.mrf.mxu0
    %v448 = vadd.f32 %v183, %v447
    %v449 = vpop.f32.mrf.mxu0
    %v450 = vpop.f32.mrf.mxu0
    %v451 = vadd.f32 %v188, %v450
    %v452 = vpop.f32.mrf.mxu0
    %453 = vmatprep.mubr.bf16.mxu0 0
    %454 = vmatmul.mubr.bf16.gmra.mxu0 %v257
    %v455 = vpop.f32.mrf.mxu0
    %v456 = vadd.f32 %v193, %v455
    %v457 = vpop.f32.mrf.mxu0
    %v458 = vpop.f32.mrf.mxu0
    %v459 = vadd.f32 %v198, %v458
    %v460 = vpop.f32.mrf.mxu0
    %461 = vmatprep.mubr.bf16.mxu0 0
    %462 = vmatmul.mubr.bf16.gmra.mxu0 %v258
    %v463 = vpop.f32.mrf.mxu0
    %v464 = vadd.f32 %v203, %v463
    %v465 = vpop.f32.mrf.mxu0
    %v466 = vpop.f32.mrf.mxu0
    %v467 = vadd.f32 %v208, %v466
    %v468 = vpop.f32.mrf.mxu0
    %469 = vmatprep.mubr.bf16.mxu0 0
    %470 = vmatmul.mubr.bf16.gmra.mxu0 %v259
    %v471 = vpop.f32.mrf.mxu0
    %v472 = vadd.f32 %v213, %v471
    %v473 = vpop.f32.mrf.mxu0
    %v474 = vpop.f32.mrf.mxu0
    %v475 = vadd.f32 %v218, %v474
    %v476 = vpop.f32.mrf.mxu0
    %477 = vdwg.mxu0
    %v478 = vmax.f32 %v303, 0.0
    %v479 = vmax.f32 %v305, 0.0
    %v480 = vmax.f32 %v416, 0.0
    %v481 = vmax.f32 %v307, 0.0
    %v482 = vmax.f32 %v309, 0.0
    %v483 = vmax.f32 %v419, 0.0
    %v484 = vmax.f32 %v313, 0.0
    %v485 = vmax.f32 %v315, 0.0
    %v486 = vmax.f32 %v424, 0.0
    %v487 = vmax.f32 %v317, 0.0
    %v488 = vmax.f32 %v319, 0.0
    %v489 = vmax.f32 %v427, 0.0
    %v490 = vmax.f32 %v323, 0.0
    %v491 = vmax.f32 %v325, 0.0
    %v492 = vmax.f32 %v432, 0.0
    %v493 = vmax.f32 %v327, 0.0
    %v494 = vmax.f32 %v329, 0.0
    %v495 = vmax.f32 %v435, 0.0
    %v496 = vmax.f32 %v333, 0.0
    %v497 = vmax.f32 %v335, 0.0
    %v498 = vmax.f32 %v440, 0.0
    %v499 = vmax.f32 %v337, 0.0
    %v500 = vmax.f32 %v339, 0.0
    %v501 = vmax.f32 %v443, 0.0
    %v502 = vmax.f32 %v343, 0.0
    %v503 = vmax.f32 %v345, 0.0
    %v504 = vmax.f32 %v448, 0.0
    %v505 = vmax.f32 %v347, 0.0
    %v506 = vmax.f32 %v349, 0.0
    %v507 = vmax.f32 %v451, 0.0
    %v508 = vmax.f32 %v353, 0.0
    %v509 = vmax.f32 %v355, 0.0
    %v510 = vmax.f32 %v456, 0.0
    %v511 = vmax.f32 %v357, 0.0
    %v512 = vmax.f32 %v359, 0.0
    %v513 = vmax.f32 %v459, 0.0
    %v514 = vmax.f32 %v363, 0.0
    %v515 = vmax.f32 %v365, 0.0
    %v516 = vmax.f32 %v464, 0.0
    %v517 = vmax.f32 %v367, 0.0
    %v518 = vmax.f32 %v369, 0.0
    %v519 = vmax.f32 %v467, 0.0
    %v520 = vmax.f32 %v373, 0.0
    %v521 = vmax.f32 %v375, 0.0
    %v522 = vmax.f32 %v472, 0.0
    %v523 = vmax.f32 %v377, 0.0
    %v524 = vmax.f32 %v379, 0.0
    %v525 = vmax.f32 %v475, 0.0
    %v526 = vpack.c.bf16 %v481, %v478
    %v527 = vpack.c.bf16 %v482, %v479
    %v528 = vpack.c.bf16 %v483, %v480
    %v529 = vpack.c.bf16 %v487, %v484
    %v530 = vpack.c.bf16 %v488, %v485
    %v531 = vpack.c.bf16 %v489, %v486
    %v532 = vpack.c.bf16 %v493, %v490
    %v533 = vpack.c.bf16 %v494, %v491
    %v534 = vpack.c.bf16 %v495, %v492
    %v535 = vpack.c.bf16 %v499, %v496
    %v536 = vpack.c.bf16 %v500, %v497
    %v537 = vpack.c.bf16 %v501, %v498
    %v538 = vpack.c.bf16 %v505, %v502
    %v539 = vpack.c.bf16 %v506, %v503
    %v540 = vpack.c.bf16 %v507, %v504
    %v541 = vpack.c.bf16 %v511, %v508
    %v542 = vpack.c.bf16 %v512, %v509
    %v543 = vpack.c.bf16 %v513, %v510
    %v544 = vpack.c.bf16 %v517, %v514
    %v545 = vpack.c.bf16 %v518, %v515
    %v546 = vpack.c.bf16 %v519, %v516
    %v547 = vpack.c.bf16 %v523, %v520
    %v548 = vpack.c.bf16 %v524, %v521
    %v549 = vpack.c.bf16 %v525, %v522
    %v550 = vld [vmem:[%s3] sm:$0xf]
    %v551 = vld [vmem:[%s4] sm:$0xff]
    %553 = vset.pattern.permute.xlu0 0
    %554 = vperm.xlu0 %553, %v551
    %v555 = vpop.permute.xlu0 %554
    %557 = vmatprep.subr.bf16.mxu0 %v548
    %558 = vmatpush1.bf16.msra.mxu0 %v547
    %559 = vmatprep.subr.bf16.mxu0 %v545
    %560 = vmatpush1.bf16.msra.mxu0 %v544
    %561 = vmatprep.subr.bf16.mxu0 %v542
    %562 = vmatpush1.bf16.msra.mxu0 %v541
    %563 = vmatprep.subr.bf16.mxu0 %v539
    %564 = vmatpush1.bf16.msra.mxu0 %v538
    %565 = vmatprep.subr.bf16.mxu0 %v536
    %566 = vmatpush1.bf16.msra.mxu0 %v535
    %567 = vmatprep.subr.bf16.mxu0 %v533
    %568 = vmatpush1.bf16.msra.mxu0 %v532
    %569 = vmatprep.subr.bf16.mxu0 %v530
    %570 = vmatpush1.bf16.msra.mxu0 %v529
    %571 = vmatprep.subr.bf16.mxu0 %v527
    %572 = vmatpush1.bf16.msra.mxu0 %v526
    %573 = vmatprep.subr.bf16.mxu0 0
    %574 = vmatpush2.bf16.msra.mxu0 0
    %575 = vmatprep.subr.bf16.mxu0 0
    %576 = vmatpush2.bf16.msra.mxu0 0
    %577 = vmatprep.subr.bf16.mxu0 0
    %578 = vmatpush2.bf16.msra.mxu0 0
    %579 = vmatprep.subr.bf16.mxu0 0
    %580 = vmatpush2.bf16.msra.mxu0 0
    %581 = vmatprep.subr.bf16.mxu0 0
    %582 = vmatpush2.bf16.msra.mxu0 0
    %583 = vmatprep.subr.bf16.mxu0 0
    %584 = vmatpush2.bf16.msra.mxu0 0
    %585 = vmatprep.subr.bf16.mxu0 0
    %586 = vmatpush2.bf16.msra.mxu0 0
    %587 = vmatprep.subr.bf16.mxu0 0
    %588 = vmatpush2.bf16.msra.mxu0 0
    %589 = vmatprep.mubr.bf16.mxu0 0
    %590 = vmatmul.mubr.bf16.gmra.mxu0 %v550
    %v591 = vpop.f32.mrf.mxu0
    %v592 = vadd.f32 %v555, %v591
    %v593 = vpop.f32.mrf.mxu0
    %v594 = vadd.f32 %v555, %v593
    %v595 = vpop.f32.mrf.mxu0
    %v596 = vpop.f32.mrf.mxu0
    %597 = vdwg.mxu0
    %598 = vmatprep.subr.bf16.mxu0 0
    %599 = vmatpush1.bf16.msra.mxu0 %v549
    %600 = vmatprep.subr.bf16.mxu0 0
    %601 = vmatpush1.bf16.msra.mxu0 %v546
    %602 = vmatprep.subr.bf16.mxu0 0
    %603 = vmatpush1.bf16.msra.mxu0 %v543
    %604 = vmatprep.subr.bf16.mxu0 0
    %605 = vmatpush1.bf16.msra.mxu0 %v540
    %606 = vmatprep.subr.bf16.mxu0 0
    %607 = vmatpush1.bf16.msra.mxu0 %v537
    %608 = vmatprep.subr.bf16.mxu0 0
    %609 = vmatpush1.bf16.msra.mxu0 %v534
    %610 = vmatprep.subr.bf16.mxu0 0
    %611 = vmatpush1.bf16.msra.mxu0 %v531
    %612 = vmatprep.subr.bf16.mxu0 0
    %613 = vmatpush1.bf16.msra.mxu0 %v528
    %614 = vmatprep.subr.bf16.mxu0 0
    %615 = vmatpush2.bf16.msra.mxu0 0
    %616 = vmatprep.subr.bf16.mxu0 0
    %617 = vmatpush2.bf16.msra.mxu0 0
    %618 = vmatprep.subr.bf16.mxu0 0
    %619 = vmatpush2.bf16.msra.mxu0 0
    %620 = vmatprep.subr.bf16.mxu0 0
    %621 = vmatpush2.bf16.msra.mxu0 0
    %622 = vmatprep.subr.bf16.mxu0 0
    %623 = vmatpush2.bf16.msra.mxu0 0
    %624 = vmatprep.subr.bf16.mxu0 0
    %625 = vmatpush2.bf16.msra.mxu0 0
    %626 = vmatprep.subr.bf16.mxu0 0
    %627 = vmatpush2.bf16.msra.mxu0 0
    %628 = vmatprep.subr.bf16.mxu0 0
    %629 = vmatpush2.bf16.msra.mxu0 0
    %630 = vmatprep.mubr.bf16.mxu0 0
    %631 = vmatmul.mubr.bf16.gmra.mxu0 %v550
    %v632 = vpop.f32.mrf.mxu0
    %v633 = vadd.f32 %v555, %v632
    %v634 = vpop.f32.mrf.mxu0
    %v635 = vpop.f32.mrf.mxu0
    %v636 = vpop.f32.mrf.mxu0
    %637 = vdwg.mxu0
    %638 = vst [vmem:[#allocation5] sm:$0xff] %v592
    %639 = vst [vmem:[#allocation5 + $0x8] sm:$0xff] %v594
    %640 = vst [vmem:[#allocation5 + $0x10] sm:$0xff] %v633
    // Predicated region
    $region26: #{tpu_custom_call.1} parent=1 // pred_check
      _
    $region27: #{tpu_custom_call.1} parent=1 // pred_check_branch
      %642 = sbr.rel (0) target = $region29
    $region28: #{tpu_custom_call.1} parent=1 // pred_region
      %s644 = ssub.s32 384, 384
      %645 = vsyncadd [#allocation4], %s644
      %s647 = sshll.u32 [#allocation5], 4
      %s648 = int_to_ptr.vmem [resolvable:$true] %s647
      %650 = dma.vmem_to_hbm [thread:$0]  %s648, 384, %s5, [#allocation4]
    $region29: #{tpu_custom_call.1} parent=1 // pred_fallthru
      _
    // Predicated region
    $region30: #{tpu_custom_call.1} parent=1 // pred_check
      _
    $region31: #{tpu_custom_call.1} parent=1 // pred_check_branch
      %652 = sbr.rel (0) target = $region33
    $region32: #{tpu_custom_call.1} parent=1 // pred_region
      %653 = dma.done [#allocation4], 384
    $region33: #{tpu_custom_call.1} parent=1 // pred_fallthru
      _
    %654 = vsyncpa [#allocation3], 1
    %655 = vsyncpa [#allocation4], 1

</llo_original>
